<compile_context>
chip_gen: v5e
topology: v5e:2x2
jax: 0.10.0
libtpu: 0.0.40
codegen_flags: <defaults>
</compile_context>

<pallas_src>
import functools

import jax
import jax.numpy as jnp
from jax.experimental import pallas as pl
from jax.experimental.pallas import tpu as pltpu

_LANE = 128


def _sublane_multiple(dtype):
    # f32 -> 8, bf16 -> 16, int8/fp8 -> 32 (sub-32-bit dtypes pack along sublanes).
    return max(8, 32 // jnp.dtype(dtype).itemsize)


def _vmem_capacity_bytes():
    try:
        return int(pltpu.get_tpu_info().vmem_capacity_bytes)
    except Exception:
        return 64 * 2**20  # conservative fallback (v7x per-TensorCore VMEM)


def _choose_tile_n(n_rows, n_classes, dtype, col_chunk, vmem_cap):
    itemsize = jnp.dtype(dtype).itemsize
    sub = _sublane_multiple(dtype)
    c_lanes = pl.cdiv(n_classes, _LANE) * _LANE
    # Per-row VMEM working set:
    #   2x pipeline buffers of the native-dtype logits tile,
    #   2x lane-padded (row, 1) int32 targets buffers (128 lanes * 4 B each),
    #   ~3 f32 per-chunk intermediates (upcast / exp / one-hot select).
    per_row = (2 * c_lanes * itemsize
               + 2 * _LANE * 4
               + 3 * min(c_lanes, col_chunk) * 4)
    # Working-set budget ~1/3 of physical VMEM (leaves room for Mosaic scratch).
    budget = min(max(vmem_cap // 3, 8 * 2**20), 40 * 2**20)
    tile = budget // per_row
    tile = max(sub, (tile // sub) * sub)
    n_ceil = pl.cdiv(n_rows, sub) * sub
    return min(tile, max(sub, n_ceil))


def _focal_loss_kernel(logits_ref, targets_ref, out_ref, *,
                       gamma, n_rows, tile_n, tiles_per_part, col_chunk, has_tail):
    # logits_ref : (tile_n, C)  native dtype (f32/bf16), VMEM
    # targets_ref: (tile_n, 1)  int32, VMEM
    # out_ref    : (1, 1)       f32 per-part scalar accumulator (resident across steps)
    part = pl.program_id(0)
    step = pl.program_id(1)

    @pl.when(step == 0)
    def _init():
        out_ref[...] = jnp.zeros_like(out_ref)

    tgt = targets_ref[...]                                   # (tile_n, 1) int32
    n_cols = logits_ref.shape[1]
    starts = list(range(0, n_cols, col_chunk))               # static chunk starts

    # ---- pass 1: per-row max (per-chunk upcast; no full f32 temp) ----
    row_max = jnp.full((tile_n, 1), -jnp.inf, dtype=jnp.float32)
    for c0 in starts:
        cw = min(col_chunk, n_cols - c0)
        xc = logits_ref[:, c0:c0 + cw].astype(jnp.float32)
        row_max = jnp.maximum(row_max, jnp.max(xc, axis=-1, keepdims=True))

    # ---- pass 2: fused exp-sum + one-hot target-logit gather ----
    sumexp = jnp.zeros((tile_n, 1), dtype=jnp.float32)
    tgt_logit = jnp.zeros((tile_n, 1), dtype=jnp.float32)
    for c0 in starts:
        cw = min(col_chunk, n_cols - c0)
        xc = logits_ref[:, c0:c0 + cw].astype(jnp.float32)
        sumexp = sumexp + jnp.sum(jnp.exp(xc - row_max), axis=-1, keepdims=True)
        col_ids = c0 + jax.lax.broadcasted_iota(jnp.int32, (tile_n, cw), 1)
        tgt_logit = tgt_logit + jnp.sum(
            jnp.where(col_ids == tgt, xc, 0.0), axis=-1, keepdims=True)

    # Per-sample cross-entropy (clamped >= 0) and pt via exp * approx-reciprocal
    # (avoids the serial log->exp EUP chain for pt).
    ce = jnp.maximum(row_max + jnp.log(sumexp) - tgt_logit, 0.0)
    pt = jnp.exp(tgt_logit - row_max) * pl.reciprocal(sumexp, approx=True)
    w = jnp.clip(1.0 - pt, 0.0, 1.0)

    # gamma is a static Python float: specialize small-integer powers to multiplies.
    if gamma == 0.0:
        weight = jnp.ones_like(w)
    elif gamma == 1.0:
        weight = w
    elif gamma == 2.0:
        weight = w * w
    elif gamma == 3.0:
        weight = w * w * w
    else:
        weight = w ** gamma                                   # w >= 0, safe pow

    focal = weight * ce                                       # alpha applied in wrapper

    if has_tail:
        row0 = (part * tiles_per_part + step) * tile_n

        @pl.when(row0 + tile_n > n_rows)
        def _tail():
            row_ids = row0 + jax.lax.broadcasted_iota(jnp.int32, (tile_n, 1), 0)
            masked = jnp.where(row_ids < n_rows, focal, 0.0)
            out_ref[...] += jnp.sum(masked, keepdims=True)

        @pl.when(row0 + tile_n <= n_rows)
        def _full():
            out_ref[...] += jnp.sum(focal, keepdims=True)
    else:
        out_ref[...] += jnp.sum(focal, keepdims=True)


def focal_loss(logits, targets, alpha=1.0, gamma=2.0, *, tile_n=None, num_parts=1):
    """Equivalent of FocalLoss(alpha, gamma).forward(logits, targets).

    num_parts=2 splits the batch across the leading "parallel" grid axis (useful only on
    2-TensorCore chips such as v7x); leave at 1 on single-TC v5e/v6e.
    """
    n, c = logits.shape
    dtype = logits.dtype
    itemsize = jnp.dtype(dtype).itemsize
    sub = _sublane_multiple(dtype)
    col_chunk = c if c <= 512 else 512
    vmem_cap = _vmem_capacity_bytes()

    if tile_n is None:
        tile_n = _choose_tile_n(n, c, dtype, col_chunk, vmem_cap)
    tile_n = max(sub, (int(tile_n) // sub) * sub)

    total_tiles = pl.cdiv(n, tile_n)
    num_parts = max(1, int(num_parts))
    if num_parts > total_tiles:
        num_parts = 1
    tiles_per_part = pl.cdiv(total_tiles, num_parts)
    need_clamp = num_parts * tiles_per_part > total_tiles
    has_tail = num_parts * tiles_per_part * tile_n > n

    targets_2d = targets.astype(jnp.int32).reshape(n, 1)

    def tile_index(p, i):
        t = p * tiles_per_part + i
        if need_clamp:
            t = jnp.minimum(t, total_tiles - 1)   # duplicated tiles are fully masked
        return t

    kernel = functools.partial(
        _focal_loss_kernel, gamma=float(gamma), n_rows=n, tile_n=tile_n,
        tiles_per_part=tiles_per_part, col_chunk=col_chunk, has_tail=has_tail)

    # VMEM limit = actual double-buffered working set + Mosaic scratch headroom,
    # capped at min(64 MiB, 3/4 of physical VMEM) -> ~48 MiB on v7x, 64 MiB on v5e/v6e.
    c_lanes = pl.cdiv(c, _LANE) * _LANE
    usage = (2 * tile_n * c_lanes * itemsize                  # logits pipeline buffers
             + 2 * tile_n * _LANE * 4                         # lane-padded targets buffers
             + 3 * tile_n * min(c_lanes, col_chunk) * 4       # per-chunk f32 temps
             + (4 << 20))                                     # compiler scratch headroom
    vmem_limit = int(min(min(64 * 2**20, (vmem_cap * 3) // 4),
                         max(16 * 2**20, usage)))

    partials = pl.pallas_call(
        kernel,
        out_shape=jax.ShapeDtypeStruct((num_parts, 1, 1), jnp.float32),
        grid=(num_parts, tiles_per_part),
        in_specs=[
            pl.BlockSpec((tile_n, c), lambda p, i: (tile_index(p, i), 0)),
            pl.BlockSpec((tile_n, 1), lambda p, i: (tile_index(p, i), 0)),
        ],
        out_specs=pl.BlockSpec((None, 1, 1), lambda p, i: (p, 0, 0)),
        compiler_params=pltpu.CompilerParams(
            dimension_semantics=("parallel", "arbitrary"),
            vmem_limit_bytes=vmem_limit),
        cost_estimate=pl.CostEstimate(
            flops=int(6 * n * c),
            transcendentals=int(n * c + 3 * n),
            bytes_accessed=int(n * c * itemsize + n * 4 + num_parts * 4)),
    )(logits, targets_2d)

    # Tiny finalization (alpha scale + mean) stays in the wrapper.
    return alpha * jnp.sum(partials) / jnp.float32(n)


def _focal_loss_ref(logits, targets, alpha=1.0, gamma=2.0):
    # Pure-JAX reference for validation.
    logits = logits.astype(jnp.float32)
    lse = jax.scipy.special.logsumexp(logits, axis=-1)
    tgt_logit = jnp.take_along_axis(
        logits, targets.astype(jnp.int32)[:, None], axis=-1)[:, 0]
    ce = lse - tgt_logit
    pt = jnp.exp(-ce)
    return jnp.mean(alpha * (1.0 - pt) ** gamma * ce)


if __name__ == "__main__":
    key = jax.random.PRNGKey(0)

    def _check(out, ref, name):
        # Tolerance accounts for the approximate EUP reciprocal used for pt.
        assert jnp.allclose(out, ref, rtol=5e-3, atol=1e-4), (name, out, ref)

    # --- Test 1: small batch, f32, auto tile (single tile, no tail) ---
    k1, k2, key = jax.random.split(key, 3)
    N, C = 8, 32
    logits = jax.random.normal(k1, (N, C), dtype=jnp.float32)
    targets = jax.random.randint(k2, (N,), 0, C, dtype=jnp.int32)
    out = jax.block_until_ready(focal_loss(logits, targets, alpha=1.0, gamma=2.0))
    _check(out, _focal_loss_ref(logits, targets, 1.0, 2.0), "t1")

    # --- Test 2: multi-step grid, ragged tail handled by in-kernel masking (no jnp.pad) ---
    k1, k2, key = jax.random.split(key, 3)
    N2, C2 = 40, 32
    logits2 = jax.random.normal(k1, (N2, C2), dtype=jnp.float32)
    targets2 = jax.random.randint(k2, (N2,), 0, C2, dtype=jnp.int32)
    out2 = jax.block_until_ready(
        focal_loss(logits2, targets2, alpha=0.5, gamma=2.0, tile_n=16))
    _check(out2, _focal_loss_ref(logits2, targets2, 0.5, 2.0), "t2")

    # --- Test 3: bf16 logits ingested directly (per-chunk upcast), non-integer gamma,
    #             auto tile rounds to the bf16 sublane multiple (16) ---
    k1, k2, key = jax.random.split(key, 3)
    N3, C3 = 48, 160
    logits3 = jax.random.normal(k1, (N3, C3), dtype=jnp.float32).astype(jnp.bfloat16)
    targets3 = jax.random.randint(k2, (N3,), 0, C3, dtype=jnp.int32)
    out3 = jax.block_until_ready(focal_loss(logits3, targets3, alpha=1.0, gamma=1.5))
    _check(out3, _focal_loss_ref(logits3.astype(jnp.float32), targets3, 1.0, 1.5), "t3")

    # --- Test 4: C > 512 exercises the column-chunked max / exp-sum+gather passes ---
    k1, k2, key = jax.random.split(key, 3)
    N4, C4 = 24, 640
    logits4 = jax.random.normal(k1, (N4, C4), dtype=jnp.float32)
    targets4 = jax.random.randint(k2, (N4,), 0, C4, dtype=jnp.int32)
    out4 = jax.block_until_ready(focal_loss(logits4, targets4, alpha=1.0, gamma=2.0))
    _check(out4, _focal_loss_ref(logits4, targets4, 1.0, 2.0), "t4")

    # --- Test 5: 2-part split (v7x-style), even division (no clamp) ---
    k1, k2, key = jax.random.split(key, 3)
    N5, C5 = 64, 64
    logits5 = jax.random.normal(k1, (N5, C5), dtype=jnp.float32)
    targets5 = jax.random.randint(k2, (N5,), 0, C5, dtype=jnp.int32)
    out5 = jax.block_until_ready(
        focal_loss(logits5, targets5, alpha=1.0, gamma=2.0, tile_n=16, num_parts=2))
    _check(out5, _focal_loss_ref(logits5, targets5, 1.0, 2.0), "t5")

    # --- Test 6: 2-part split with uneven tiles (clamped duplicate tile + tail mask) ---
    out6 = jax.block_until_ready(
        focal_loss(logits2, targets2, alpha=1.0, gamma=2.0, tile_n=16, num_parts=2))
    _check(out6, _focal_loss_ref(logits2, targets2, 1.0, 2.0), "t6")

    print("KERNEL_OK")
</pallas_src>

<mosaic_0001>
module attributes {stable_mosaic.version = 11 : i64} {
  func.func @_focal_loss_kernel(%arg0: i32, %arg1: i32, %arg2: memref<8x32xf32, #tpu.memory_space<vmem>>, %arg3: memref<8x1xi32, #tpu.memory_space<vmem>>, %arg4: memref<1x1x1xf32, #tpu.memory_space<vmem>>) attributes {dimension_semantics = [#tpu.dimension_semantics<parallel>, #tpu.dimension_semantics<arbitrary>], iteration_bounds = array<i64: 1, 1>, scalar_prefetch = 0 : i64, scratch_operands = 0 : i64, tpu.core_type = #tpu.core_type<tc>, window_params = [{transform_indices = @transform_0, window_bounds = array<i64: 8, 32>}, {transform_indices = @transform_1, window_bounds = array<i64: 8, 1>}, {transform_indices = @transform_2, window_bounds = array<i64: 1, 1, 1>}]} {
    %c0_i32 = arith.constant 0 : i32
    %0 = arith.cmpi eq, %arg1, %c0_i32 : i32
    %1 = arith.extui %0 : i1 to i32
    %c0_i32_0 = arith.constant 0 : i32
    %2 = arith.cmpi ne, %1, %c0_i32_0 : i32
    scf.if %2 {
      %cst_24 = arith.constant 0.000000e+00 : f32
      %56 = vector.broadcast %cst_24 : f32 to vector<1x1xf32>
      %c0_25 = arith.constant 0 : index
      %c0_26 = arith.constant 0 : index
      %c0_27 = arith.constant 0 : index
      %57 = vector.load %arg4[%c0_25, %c0_26, %c0_27] : memref<1x1x1xf32, #tpu.memory_space<vmem>>, vector<1x1x1xf32>
      %58 = vector.shape_cast %57 : vector<1x1x1xf32> to vector<1x1xf32>
      %59 = vector.shape_cast %56 : vector<1x1xf32> to vector<1x1x1xf32>
      tpu.vector_store %arg4[%c0_25, %c0_26, %c0_27], %59 {strides = array<i32>} : memref<1x1x1xf32, #tpu.memory_space<vmem>>, vector<1x1x1xf32>,
    } else {
    }
    %c0 = arith.constant 0 : index
    %c0_1 = arith.constant 0 : index
    %3 = vector.load %arg3[%c0, %c0_1] : memref<8x1xi32, #tpu.memory_space<vmem>>, vector<8x1xi32>
    %cst = arith.constant 0xFF800000 : f32
    %4 = vector.broadcast %cst : f32 to vector<8x1xf32>
    %c0_2 = arith.constant 0 : index
    %c0_3 = arith.constant 0 : index
    %5 = vector.load %arg2[%c0_2, %c0_3] : memref<8x32xf32, #tpu.memory_space<vmem>>, vector<8x32xf32>
    %cst_4 = arith.constant dense<0xFF800000> : vector<8xf32>
    %6 = vector.multi_reduction <maximumf>, %5, %cst_4 [1] : vector<8x32xf32> to vector<8xf32>
    %7 = vector.shape_cast %6 : vector<8xf32> to vector<8x1xf32>
    %8 = arith.maximumf %4, %7 : vector<8x1xf32>
    %cst_5 = arith.constant 0.000000e+00 : f32
    %9 = vector.broadcast %cst_5 : f32 to vector<8x1xf32>
    %cst_6 = arith.constant 0.000000e+00 : f32
    %10 = vector.broadcast %cst_6 : f32 to vector<8x1xf32>
    %c0_7 = arith.constant 0 : index
    %c0_8 = arith.constant 0 : index
    %11 = vector.load %arg2[%c0_7, %c0_8] : memref<8x32xf32, #tpu.memory_space<vmem>>, vector<8x32xf32>
    %12 = vector.broadcast %8 : vector<8x1xf32> to vector<8x32xf32>
    %13 = arith.subf %11, %12 : vector<8x32xf32>
    %14 = math.exp %13 : vector<8x32xf32>
    %cst_9 = arith.constant dense<0.000000e+00> : vector<8xf32>
    %15 = vector.multi_reduction <add>, %14, %cst_9 [1] : vector<8x32xf32> to vector<8xf32>
    %16 = vector.shape_cast %15 : vector<8xf32> to vector<8x1xf32>
    %17 = arith.addf %9, %16 : vector<8x1xf32>
    %18 = tpu.iota {dimensions = array<i32: 1>} : vector<8x32xi32>
    %c0_i32_10 = arith.constant 0 : i32
    %19 = vector.broadcast %c0_i32_10 : i32 to vector<8x32xi32>
    %20 = arith.addi %19, %18 : vector<8x32xi32>
    %21 = vector.broadcast %3 : vector<8x1xi32> to vector<8x32xi32>
    %22 = arith.cmpi eq, %20, %21 : vector<8x32xi32>
    %cst_11 = arith.constant 0.000000e+00 : f32
    %23 = vector.broadcast %cst_11 : f32 to vector<8x32xf32>
    %24 = arith.select %22, %11, %23 : vector<8x32xi1>, vector<8x32xf32>
    %cst_12 = arith.constant dense<0.000000e+00> : vector<8xf32>
    %25 = vector.multi_reduction <add>, %24, %cst_12 [1] : vector<8x32xf32> to vector<8xf32>
    %26 = vector.shape_cast %25 : vector<8xf32> to vector<8x1xf32>
    %27 = arith.addf %10, %26 : vector<8x1xf32>
    %28 = math.log %17 : vector<8x1xf32>
    %29 = arith.addf %8, %28 : vector<8x1xf32>
    %30 = arith.subf %29, %27 : vector<8x1xf32>
    %cst_13 = arith.constant 0.000000e+00 : f32
    %31 = vector.broadcast %cst_13 : f32 to vector<8x1xf32>
    %32 = arith.maximumf %30, %31 : vector<8x1xf32>
    %33 = arith.subf %27, %8 : vector<8x1xf32>
    %34 = math.exp %33 : vector<8x1xf32>
    %35 = tpu.reciprocal %17 {approx = true} : vector<8x1xf32> -> vector<8x1xf32>
    %36 = arith.mulf %34, %35 : vector<8x1xf32>
    %cst_14 = arith.constant 1.000000e+00 : f32
    %37 = vector.broadcast %cst_14 : f32 to vector<8x1xf32>
    %38 = arith.subf %37, %36 : vector<8x1xf32>
    %cst_15 = arith.constant 0.000000e+00 : f32
    %cst_16 = arith.constant 1.000000e+00 : f32
    %39 = vector.broadcast %cst_15 : f32 to vector<8x1xf32>
    %40 = arith.maximumf %39, %38 : vector<8x1xf32>
    %41 = vector.broadcast %cst_16 : f32 to vector<8x1xf32>
    %42 = arith.minimumf %41, %40 : vector<8x1xf32>
    %43 = arith.mulf %42, %42 : vector<8x1xf32>
    %44 = arith.mulf %43, %32 : vector<8x1xf32>
    %c0_17 = arith.constant 0 : index
    %c0_18 = arith.constant 0 : index
    %c0_19 = arith.constant 0 : index
    %45 = vector.load %arg4[%c0_17, %c0_18, %c0_19] : memref<1x1x1xf32, #tpu.memory_space<vmem>>, vector<1x1x1xf32>
    %46 = vector.shape_cast %45 : vector<1x1x1xf32> to vector<1x1xf32>
    %47 = vector.shape_cast %44 : vector<8x1xf32> to vector<1x8x1xf32>
    %cst_20 = arith.constant dense<0.000000e+00> : vector<1xf32>
    %48 = vector.multi_reduction <add>, %47, %cst_20 [1, 2] : vector<1x8x1xf32> to vector<1xf32>
    %49 = vector.shape_cast %48 : vector<1xf32> to vector<1x1x1xf32>
    %50 = vector.extract %49[0, 0, 0] : f32 from vector<1x1x1xf32>
    %51 = vector.broadcast %50 : f32 to vector<1x1xf32>
    %52 = arith.addf %46, %51 : vector<1x1xf32>
    %c0_21 = arith.constant 0 : index
    %c0_22 = arith.constant 0 : index
    %c0_23 = arith.constant 0 : index
    %53 = vector.load %arg4[%c0_21, %c0_22, %c0_23] : memref<1x1x1xf32, #tpu.memory_space<vmem>>, vector<1x1x1xf32>
    %54 = vector.shape_cast %53 : vector<1x1x1xf32> to vector<1x1xf32>
    %55 = vector.shape_cast %52 : vector<1x1xf32> to vector<1x1x1xf32>
    tpu.vector_store %arg4[%c0_21, %c0_22, %c0_23], %55 {strides = array<i32>} : memref<1x1x1xf32, #tpu.memory_space<vmem>>, vector<1x1x1xf32>,
    return
  }
  func.func @transform_0(%arg0: i32, %arg1: i32) -> (i32, i32) {
    %c1_i32 = arith.constant 1 : i32
    %0 = arith.muli %arg0, %c1_i32 : i32
    %1 = arith.addi %0, %arg1 : i32
    %c0_i32 = arith.constant 0 : i32
    %c0_i32_0 = arith.constant 0 : i32
    return %1, %c0_i32 : i32, i32
  }
  func.func @transform_1(%arg0: i32, %arg1: i32) -> (i32, i32) {
    %c1_i32 = arith.constant 1 : i32
    %0 = arith.muli %arg0, %c1_i32 : i32
    %1 = arith.addi %0, %arg1 : i32
    %c0_i32 = arith.constant 0 : i32
    %c0_i32_0 = arith.constant 0 : i32
    return %1, %c0_i32 : i32, i32
  }
  func.func @transform_2(%arg0: i32, %arg1: i32) -> (i32, i32, i32) {
    %c0_i32 = arith.constant 0 : i32
    %c0_i32_0 = arith.constant 0 : i32
    %c0_i32_1 = arith.constant 0 : i32
    return %arg0, %c0_i32, %c0_i32_0 : i32, i32, i32
  }
}

</mosaic_0001>

<llo_original>
// kernel: tpu_custom_call.1
$region0: #{tpu_custom_call.1}
  #allocation0 [shape = 'u32[]', space=smem, size = 0x4, offset = 0x4, fixed_abs, tag = 'smem constant byte address 0x4 - core index']
  #allocation1 [shape = 'u32[72,128]{1,0:T(1,128)}', space=vmem, size = 0x9000, scoped, tag = 'internal scratch']
  %s0 = inlined_call_operand.vmem [shape: f32[8,32], index: 0, kind: input, shape index: {}]
  %s1 = inlined_call_operand.vmem [shape: s32[8,1], index: 1, kind: input, shape index: {}]
  %s2 = inlined_call_operand.hbm [shape: f32[1,1,1], index: 2, kind: output, shape index: {}]
  %s3 = sld [smem:[#allocation0]]
  $region22: #{tpu_custom_call.1} parent=0
    _
  %s5 = ssub.s32 1, %s3
  %s6 = scalar_select 0, %s5, %s3
  $region1: #{tpu_custom_call.1} parent=0
    #allocation2 [shape = 'u8[512]{0}', space=vmem, size = 0x400, scoped, tag = 'output window, operand 0, single buffered']
    #allocation3 [shape = 's32[1]{0}', space=sflag, size = 0x4, scoped, tag = 'scoped memory for tpu_custom_call.1']
    %7 = vsyncpa [#allocation3], 0
    // Predicated region
    $region2: #{tpu_custom_call.1} parent=1 // pred_check
      _
    $region3: #{tpu_custom_call.1} parent=1 // pred_check_branch
      %9 = sbr.rel (0) target = $region5
    $region4: #{tpu_custom_call.1} parent=1 // pred_region
      %s10 = sadd.s32 0, 0
      %p11 = scmp.lt.s32.totalorder %s10, 0
      %s12 = scalar_select %p11, %s10, 0
      %s13 = smul.addr %s12, 8
      %s14 = scalar_lea.vmem %s0, %s13
      %s15 = sadd.s32 0, 0
    $region5: #{tpu_custom_call.1} parent=1 // pred_fallthru
      _
    // Predicated region
    $region6: #{tpu_custom_call.1} parent=1 // pred_check
      _
    $region7: #{tpu_custom_call.1} parent=1 // pred_check_branch
      %17 = sbr.rel (0) target = $region9
    $region8: #{tpu_custom_call.1} parent=1 // pred_region
      %s18 = sadd.s32 0, 0
      %p19 = scmp.lt.s32.totalorder %s18, 0
      %s20 = scalar_select %p19, %s18, 0
      %s21 = smul.addr %s20, 8
      %s22 = scalar_lea.vmem %s1, %s21
      %s23 = sadd.s32 0, 0
    $region9: #{tpu_custom_call.1} parent=1 // pred_fallthru
      _
    %s24 = sadd.s32 0, 0
    %p25 = scmp.lt.s32.totalorder %s24, 0
    %s26 = scalar_select %p25, %s24, 0
    %s27 = smul.addr %s26, 8
    %s28 = scalar_lea.vmem %s0, %s27
    %s29 = sadd.s32 0, 0
    %p30 = scmp.lt.s32.totalorder %s29, 0
    %s31 = scalar_select %p30, %s29, 0
    %s32 = smul.addr %s31, 8
    %s33 = scalar_lea.vmem %s1, %s32
    %s34 = sadd.s32 0, 0
    %p35 = scmp.lt.s32.totalorder %s34, 0
    %s36 = scalar_select %p35, %s34, 0
    %s37 = smul.addr %s36, 8
    %s38 = scalar_lea.vmem %s0, %s37
    %s39 = sadd.s32 0, 0
    %s40 = sadd.s32 0, 0
    %p41 = scmp.lt.s32.totalorder %s40, 0
    %s42 = scalar_select %p41, %s40, 0
    %s43 = smul.addr %s42, 8
    %s44 = scalar_lea.vmem %s1, %s43
    %s45 = sadd.s32 0, 0
    %p46 = scmp.eq.s32.totalorder 0, 0
    // Predicated region
    $region10: #{tpu_custom_call.1} parent=1 // pred_check
      %p47 = pneg %p46
    $region11: #{tpu_custom_call.1} parent=1 // pred_check_branch
      %49 = sbr.rel (%p47) target = $region13
    $region12: #{tpu_custom_call.1} parent=1 // pred_region
      %vm50 = vcmask 0
      %51 = vst.msk [vmem:[#allocation2] sm:$0x1] %vm50, 0.0
    $region13: #{tpu_custom_call.1} parent=1 // pred_fallthru
      _
    %v52 = vld [vmem:[%s44] sm:$0xff]
    %v53 = vld [vmem:[%s38] sm:$0xff]
    %vm54 = vcmask 261120
    %v55 = vsel %vm54, %v53, -inf
    %56 = vmax.xlane.f32.xlu0 %v55
    %v57 = vpop.xlane.xlu0 %56
    %v58 = vsub.f32 %v53, %v57
    %v59 = vmul.f32 %v58, 1.442695
    %v60 = vpow.pop %v59
    %v61 = vsel %vm54, %v60, 0.0
    %62 = vadd.xlane.f32.xlu0 %v61
    %v63 = vpop.xlane.xlu0 %62
    %v64 = vadd.f32 %v63, 0.0
    %v65 = vlaneseq
    %v66 = vand.u32 %v65, 127
    %67 = vset.pattern.permute.xlu0 0
    %68 = vperm.xlu0 %67, %v52
    %v69 = vpop.permute.xlu0 %68
    %vm70 = vcmp.eq.s32.totalorder %v66, %v69
    %v71 = vsel %vm70, %v53, 0.0
    %v72 = vsel %vm54, %v71, 0.0
    %73 = vadd.xlane.f32.xlu0 %v72
    %v74 = vpop.xlane.xlu0 %73
    %v75 = vadd.f32 %v74, 0.0
    %v76 = vlog2.pop %v64
    %v77 = vmul.f32 %v76, 0.6931472
    %v78 = vadd.f32 %v57, %v77
    %v79 = vsub.f32 %v78, %v75
    %v80 = vmax.f32 %v79, 0.0
    %v81 = vsub.f32 %v75, %v57
    %v82 = vmul.f32 %v81, 1.442695
    %v83 = vpow.pop %v82
    %v84 = vrcp.pop %v64
    %v85 = vmul.f32 %v83, %v84
    %v86 = vsub.f32 1.0, %v85
    %v87 = vmax.f32 %v86, 0.0
    %v88 = vmin.f32 %v87, 1.0
    %v89 = vmul.f32 %v88, %v88
    %v90 = vmul.f32 %v89, %v80
    %v91 = vld [vmem:[#allocation2] sm:$0x1]
    %vm92 = vcmask 7168
    %v93 = vsel %vm92, %v90, 0.0
    %94 = vadd.xlane.f32.xlu0 %v93
    %v95 = vpop.xlane.xlu0 %94
    %v96 = vrot.slane %v95, 4
    %v97 = vadd.f32 %v95, %v96
    %v98 = vrot.slane %v97, 2
    %v99 = vadd.f32 %v97, %v98
    %v100 = vrot.slane %v99, 1
    %v101 = vadd.f32 %v99, %v100
    %s102 = vtos %v101
    %v103 = vstv %s102
    %v104 = vadd.f32 %v91, %v103
    %vm105 = vcmask 0
    %106 = vst.msk [vmem:[#allocation2] sm:$0x1] %vm105, %v104
    // Predicated region
    $region14: #{tpu_custom_call.1} parent=1 // pred_check
      _
    $region15: #{tpu_custom_call.1} parent=1 // pred_check_branch
      %108 = sbr.rel (0) target = $region17
    $region16: #{tpu_custom_call.1} parent=1 // pred_region
      %110 = vsyncadd [#allocation3], 0
      %s112 = sshll.u32 [#allocation2], 4
      %s113 = int_to_ptr.vmem [resolvable:$true] %s112
      %s114 = sshll.u32 %s2, 4
      %s115 = int_to_ptr.hbm [resolvable:$true] %s114
      %117 = dma.vmem_to_hbm [thread:$0]  %s113, 16, %s115, [#allocation3]
    $region17: #{tpu_custom_call.1} parent=1 // pred_fallthru
      _
    // Predicated region
    $region18: #{tpu_custom_call.1} parent=1 // pred_check
      _
    $region19: #{tpu_custom_call.1} parent=1 // pred_check_branch
      %119 = sbr.rel (0) target = $region21
    $region20: #{tpu_custom_call.1} parent=1 // pred_region
      %121 = dma.done [#allocation3], 16
    $region21: #{tpu_custom_call.1} parent=1 // pred_fallthru
      _
    %122 = vsyncpa [#allocation3], 1

</llo_original>
